<compile_context>
chip_gen: v7x
topology: tpu7x:2x2x1
jax: 0.10.0
libtpu: 0.0.40
codegen_flags: <defaults>
</compile_context>

<pallas_src>
import functools

import jax
import jax.numpy as jnp
import numpy as np
from jax.experimental import pallas as pl
from jax.experimental.pallas import tpu as pltpu

LANE = 128      # lane width: pad feature/hidden/class dims to this
ROW_TILE = 16   # node-row tile (multiple of 8 sublanes; 16 = bf16 sublane pack)


def _round_up(x, m):
    return (x + m - 1) // m * m


# ----------------------------- Pallas kernels -----------------------------

def gcn_layer1_kernel(a_ref, x_ref, w1_ref, b1_ref, h_ref):
    """h[tile] = relu((A[tile, :] @ X) @ W1 + b1)  (bf16 matmuls, f32 accum)."""
    ax = jnp.dot(a_ref[...], x_ref[...], preferred_element_type=jnp.float32)
    h = jnp.dot(ax.astype(jnp.bfloat16), w1_ref[...],
                preferred_element_type=jnp.float32)
    h = jnp.maximum(h + b1_ref[...], 0.0)            # bias + ReLU in f32
    # TODO(synk): dropout is eval-mode identity; training-mode dropout would
    # draw a mask with pltpu.prng_seed + pltpu.prng_random_bits here.
    h_ref[...] = h.astype(h_ref.dtype)


def gcn_layer2_kernel(a_ref, h_ref, w2_ref, b2_ref, out_ref, *, num_classes):
    """out[tile] = log_softmax((A[tile, :] @ H) @ W2 + b2) over real classes."""
    ah = jnp.dot(a_ref[...], h_ref[...], preferred_element_type=jnp.float32)
    z = jnp.dot(ah.astype(jnp.bfloat16), w2_ref[...],
                preferred_element_type=jnp.float32)
    z = z + b2_ref[...]
    # masked log_softmax: class axis is lane-padded to LANE, only the first
    # `num_classes` lanes are real.
    col = jax.lax.broadcasted_iota(jnp.int32, z.shape, 1)
    valid = col < num_classes
    z = jnp.where(valid, z, -1e30)
    m = jnp.max(z, axis=1, keepdims=True)
    s = z - m
    e = jnp.where(valid, jnp.exp(s), 0.0)
    lse = jnp.log(jnp.sum(e, axis=1, keepdims=True))
    out_ref[...] = s - lse


# ------------------------------- wrapper -----------------------------------

def gcn_forward(a_hat, features, w1, b1, w2, b2, *, row_tile=ROW_TILE):
    n, f_in = features.shape
    hdim = w1.shape[1]
    c = w2.shape[1]

    n_pad = _round_up(n, row_tile)
    f_pad = _round_up(f_in, LANE)
    h_pad = _round_up(hdim, LANE)
    c_pad = _round_up(c, LANE)

    # Pad to lane-dense shapes; cast MXU operands to bf16 (biases stay f32).
    a_p = jnp.zeros((n_pad, n_pad), jnp.float32).at[:n, :n].set(a_hat).astype(jnp.bfloat16)
    x_p = jnp.zeros((n_pad, f_pad), jnp.float32).at[:n, :f_in].set(features).astype(jnp.bfloat16)
    w1_p = jnp.zeros((f_pad, h_pad), jnp.float32).at[:f_in, :hdim].set(w1).astype(jnp.bfloat16)
    w2_p = jnp.zeros((h_pad, c_pad), jnp.float32).at[:hdim, :c].set(w2).astype(jnp.bfloat16)
    b1_p = jnp.zeros((1, h_pad), jnp.float32).at[:, :hdim].set(b1)
    b2_p = jnp.zeros((1, c_pad), jnp.float32).at[:, :c].set(b2)

    grid = (n_pad // row_tile,)
    cparams = pltpu.CompilerParams(
        dimension_semantics=("parallel",),      # node-row tiles shard across TCs
        vmem_limit_bytes=32 * 1024 * 1024,      # above v5e's 16 MiB scoped default
    )

    def resident(shape):                        # full-array block, stays in VMEM
        return pl.BlockSpec(shape, lambda i: (0, 0))

    def row_block(cols):                        # one row-tile of A / output per step
        return pl.BlockSpec((row_tile, cols), lambda i: (i, 0))

    # ---- layer 1: H = relu(A @ X @ W1 + b1) ----
    h = pl.pallas_call(
        gcn_layer1_kernel,
        out_shape=jax.ShapeDtypeStruct((n_pad, h_pad), jnp.bfloat16),
        grid=grid,
        in_specs=[row_block(n_pad),
                  resident((n_pad, f_pad)),
                  resident((f_pad, h_pad)),
                  resident((1, h_pad))],
        out_specs=row_block(h_pad),
        compiler_params=cparams,
    )(a_p, x_p, w1_p, b1_p)

    # ---- layer 2: out = log_softmax(A @ H @ W2 + b2) ----
    out = pl.pallas_call(
        functools.partial(gcn_layer2_kernel, num_classes=c),
        out_shape=jax.ShapeDtypeStruct((n_pad, c_pad), jnp.float32),
        grid=grid,
        in_specs=[row_block(n_pad),
                  resident((n_pad, h_pad)),
                  resident((h_pad, c_pad)),
                  resident((1, c_pad))],
        out_specs=row_block(c_pad),
        compiler_params=cparams,
    )(a_p, h, w2_p, b2_p)

    return out[:n, :c]


# ---------------- glue: graph normalization + parameter init ----------------

def normalized_adjacency(edge_index, num_nodes):
    """Dense D^{-1/2} (A + I) D^{-1/2}; matches add_remaining_self_loops +
    PyG gcn_norm for an unweighted graph (multi-edges dedup'd)."""
    src = edge_index[0]
    dst = edge_index[1]
    a = jnp.zeros((num_nodes, num_nodes), jnp.float32)
    a = a.at[dst, src].set(1.0)                      # message src -> dst
    a = a + jnp.eye(num_nodes, dtype=jnp.float32)    # remaining self loops
    a = jnp.minimum(a, 1.0)                          # guard duplicate self loops
    deg = jnp.sum(a, axis=1)
    dinv = jnp.where(deg > 0, 1.0 / jnp.sqrt(deg), 0.0)
    return a * dinv[:, None] * dinv[None, :]


def glorot(key, fan_in, fan_out):
    a = (6.0 / (fan_in + fan_out)) ** 0.5
    return jax.random.uniform(key, (fan_in, fan_out), jnp.float32, -a, a)


def gcn_reference(a_hat, x, w1, b1, w2, b2):
    h = jnp.maximum(a_hat @ (x @ w1) + b1, 0.0)
    z = a_hat @ (h @ w2) + b2
    return jax.nn.log_softmax(z, axis=1)


# TODO(synk): for realistic graphs (E << N^2) the dense A_hat matmul should be
# replaced with a PrefetchScalarGridSpec-driven sparse block-gather formulation.

if __name__ == "__main__":
    key = jax.random.PRNGKey(0)
    k_x, k_e, k_w1, k_w2 = jax.random.split(key, 4)

    num_nodes = 24
    in_channels = 16
    hidden_channels = 32
    out_channels = 8
    num_edges = 64

    features = jax.random.normal(k_x, (num_nodes, in_channels), jnp.float32)
    edge_index = jax.random.randint(k_e, (2, num_edges), 0, num_nodes, jnp.int32)

    # GCNConv params: glorot weight, zero bias
    w1 = glorot(k_w1, in_channels, hidden_channels)
    b1 = jnp.zeros((1, hidden_channels), jnp.float32)
    w2 = glorot(k_w2, hidden_channels, out_channels)
    b2 = jnp.zeros((1, out_channels), jnp.float32)

    a_hat = normalized_adjacency(edge_index, num_nodes)

    out = gcn_forward(a_hat, features, w1, b1, w2, b2)
    jax.block_until_ready(out)
    assert out.shape == (num_nodes, out_channels)

    ref = gcn_reference(a_hat, features, w1, b1, w2, b2)
    np.testing.assert_allclose(np.asarray(out), np.asarray(ref), atol=1e-1)
    print("KERNEL_OK")
</pallas_src>

<mosaic_0001>
module attributes {stable_mosaic.version = 11 : i64} {
  func.func @gcn_layer1_kernel(%arg0: i32, %arg1: memref<16x32xbf16, #tpu.memory_space<vmem>>, %arg2: memref<32x128xbf16, #tpu.memory_space<vmem>>, %arg3: memref<128x128xbf16, #tpu.memory_space<vmem>>, %arg4: memref<1x128xf32, #tpu.memory_space<vmem>>, %arg5: memref<16x128xbf16, #tpu.memory_space<vmem>>) attributes {dimension_semantics = [#tpu.dimension_semantics<parallel>], iteration_bounds = array<i64: 2>, scalar_prefetch = 0 : i64, scratch_operands = 0 : i64, tpu.core_type = #tpu.core_type<tc>, window_params = [{transform_indices = @transform_0, window_bounds = array<i64: 16, 32>}, {pipeline_mode = #tpu.pipeline_mode<synchronous>, transform_indices = @transform_1, window_bounds = array<i64: 32, 128>}, {pipeline_mode = #tpu.pipeline_mode<synchronous>, transform_indices = @transform_2, window_bounds = array<i64: 128, 128>}, {pipeline_mode = #tpu.pipeline_mode<synchronous>, transform_indices = @transform_3, window_bounds = array<i64: 1, 128>}, {transform_indices = @transform_4, window_bounds = array<i64: 16, 128>}]} {
    %c0 = arith.constant 0 : index
    %c0_0 = arith.constant 0 : index
    %0 = vector.load %arg1[%c0, %c0_0] : memref<16x32xbf16, #tpu.memory_space<vmem>>, vector<16x32xbf16>
    %c0_1 = arith.constant 0 : index
    %c0_2 = arith.constant 0 : index
    %1 = vector.load %arg2[%c0_1, %c0_2] : memref<32x128xbf16, #tpu.memory_space<vmem>>, vector<32x128xbf16>
    %cst = arith.constant dense<0.000000e+00> : vector<16x128xf32>
    %2 = tpu.matmul %0, %1, %cst {dimension_numbers = #tpu.dot_dimension_numbers<[1], [0], [0], [1], [0, 0, 1, 1], [], []>} : vector<16x32xbf16>, vector<32x128xbf16>, vector<16x128xf32> -> vector<16x128xf32>
    %3 = arith.truncf %2 : vector<16x128xf32> to vector<16x128xbf16>
    %c0_3 = arith.constant 0 : index
    %c0_4 = arith.constant 0 : index
    %4 = vector.load %arg3[%c0_3, %c0_4] : memref<128x128xbf16, #tpu.memory_space<vmem>>, vector<128x128xbf16>
    %cst_5 = arith.constant dense<0.000000e+00> : vector<16x128xf32>
    %5 = tpu.matmul %3, %4, %cst_5 {dimension_numbers = #tpu.dot_dimension_numbers<[1], [0], [0], [1], [0, 0, 1, 1], [], []>} : vector<16x128xbf16>, vector<128x128xbf16>, vector<16x128xf32> -> vector<16x128xf32>
    %c0_6 = arith.constant 0 : index
    %c0_7 = arith.constant 0 : index
    %6 = vector.load %arg4[%c0_6, %c0_7] : memref<1x128xf32, #tpu.memory_space<vmem>>, vector<1x128xf32>
    %7 = vector.broadcast %6 : vector<1x128xf32> to vector<16x128xf32>
    %8 = arith.addf %5, %7 : vector<16x128xf32>
    %cst_8 = arith.constant 0.000000e+00 : f32
    %9 = vector.broadcast %cst_8 : f32 to vector<16x128xf32>
    %10 = arith.maximumf %8, %9 : vector<16x128xf32>
    %11 = arith.truncf %10 : vector<16x128xf32> to vector<16x128xbf16>
    %c0_9 = arith.constant 0 : index
    %c0_10 = arith.constant 0 : index
    %12 = vector.load %arg5[%c0_9, %c0_10] : memref<16x128xbf16, #tpu.memory_space<vmem>>, vector<16x128xbf16>
    tpu.vector_store %arg5[%c0_9, %c0_10], %11 {strides = array<i32>} : memref<16x128xbf16, #tpu.memory_space<vmem>>, vector<16x128xbf16>,
    return
  }
  func.func @transform_0(%arg0: i32) -> (i32, i32) {
    %c0_i32 = arith.constant 0 : i32
    %c0_i32_0 = arith.constant 0 : i32
    return %arg0, %c0_i32 : i32, i32
  }
  func.func @transform_1(%arg0: i32) -> (i32, i32) {
    %c0_i32 = arith.constant 0 : i32
    %c0_i32_0 = arith.constant 0 : i32
    %c0_i32_1 = arith.constant 0 : i32
    return %c0_i32, %c0_i32_0 : i32, i32
  }
  func.func @transform_2(%arg0: i32) -> (i32, i32) {
    %c0_i32 = arith.constant 0 : i32
    %c0_i32_0 = arith.constant 0 : i32
    %c0_i32_1 = arith.constant 0 : i32
    return %c0_i32, %c0_i32_0 : i32, i32
  }
  func.func @transform_3(%arg0: i32) -> (i32, i32) {
    %c0_i32 = arith.constant 0 : i32
    %c0_i32_0 = arith.constant 0 : i32
    %c0_i32_1 = arith.constant 0 : i32
    return %c0_i32, %c0_i32_0 : i32, i32
  }
  func.func @transform_4(%arg0: i32) -> (i32, i32) {
    %c0_i32 = arith.constant 0 : i32
    %c0_i32_0 = arith.constant 0 : i32
    return %arg0, %c0_i32 : i32, i32
  }
}

</mosaic_0001>

<llo_original>
// kernel: tpu_custom_call.1
$region0: #{tpu_custom_call.1}
  #allocation0 [shape = 'u32[]', space=smem, size = 0x4, offset = 0x4, fixed_abs, tag = 'smem constant byte address 0x4 - core index']
  #allocation1 [shape = 'u32[144,128]{1,0:T(1,128)}', space=vmem, size = 0x12000, scoped, tag = 'internal scratch']
  %s0 = inlined_call_operand.hbm [shape: bf16[32,32], index: 0, kind: input, shape index: {}]
  %s1 = inlined_call_operand.hbm [shape: bf16[32,128], index: 1, kind: input, shape index: {}]
  %s2 = inlined_call_operand.hbm [shape: bf16[128,128], index: 2, kind: input, shape index: {}]
  %s3 = inlined_call_operand.vmem [shape: f32[1,128], index: 3, kind: input, shape index: {}]
  %s4 = inlined_call_operand.hbm [shape: bf16[32,128], index: 4, kind: output, shape index: {}]
  %s5 = sld [smem:[#allocation0]]
  $region61: #{tpu_custom_call.1} parent=0
    _
  %s7 = ssub.s32 1, %s5
  %s8 = scalar_select 0, %s7, %s5
  $region1: #{tpu_custom_call.1} parent=0
    #allocation2 [shape = 'u8[8192]{0}', space=vmem, size = 0x2000, scoped, tag = 'input window, operand 0']
    #allocation3 [shape = 's32[2]{0}', space=sflag, size = 0x8, scoped, tag = 'scoped memory for tpu_custom_call.1']
    #allocation4 [shape = 's32[2]{0}', space=sflag, size = 0x8, scoped, tag = 'scoped memory for tpu_custom_call.1']
    #allocation5 [shape = 'u8[8192]{0}', space=vmem, size = 0x2000, scoped, tag = 'input window, operand 1, single buffered']
    #allocation6 [shape = 's32[1]{0}', space=sflag, size = 0x4, scoped, tag = 'scoped memory for tpu_custom_call.1']
    #allocation7 [shape = 'u8[32768]{0}', space=vmem, size = 0x8000, scoped, tag = 'input window, operand 2, single buffered']
    #allocation8 [shape = 'u8[8192]{0}', space=vmem, size = 0x2000, scoped, tag = 'output window, operand 0']
    %9 = vsyncpa [#allocation3], 0
    %s10 = scalar_lea.sflag [#allocation3], 1
    %11 = vsyncpa %s10, 0
    %12 = vsyncpa [#allocation6], 0
    %13 = vsyncpa [#allocation4], 0
    %s14 = scalar_lea.sflag [#allocation4], 1
    %15 = vsyncpa %s14, 0
    loop: start=0, step=1, limit=4
    $region2: #{tpu_custom_call.1} parent=1 // loop_pre_header
      _
    $region3: #{tpu_custom_call.1} parent=1 // loop_header
      %s17 = sphi 0, %s21
      %p18 = scmp.ge.s32.totalorder %s17, 4
      %s27 = sphi 0, %s29
      %s30 = sphi 0, %s27
      %s31 = sphi 0, %s30
      %s47 = sphi 0, %s31
      %s51 = sphi 0, %s51
      %s53 = sphi 0, %s51
      %s54 = sphi 0, %s53
      %s68 = sphi 0, %s54
      %s72 = sphi 0, %s72
      %s74 = sphi 0, %s72
      %s75 = sphi 0, %s74
      %s89 = sphi 0, %s75
      %s93 = sphi 0, %s93
      %s95 = sphi 0, %s93
      %s96 = sphi 0, %s95
      %s110 = sphi 0, %s96
      %s116 = sphi 0, %s118
      %s119 = sphi 0, %s116
      %s120 = sphi 0, %s119
      %s136 = sphi 0, %s120
    $region4: #{tpu_custom_call.1} parent=1 // loop_header_branch
      %20 = sbr.rel (%p18) target = $region8
    $region5: #{tpu_custom_call.1} parent=1 // loop_body
      %s22 = ssub.s32 %s17, 1
      %s23 = ssub.s32 %s17, 2
      %s24 = sadd.s32 %s17, 1
      %s25 = ssub.s32 %s17, %s24
      %p26 = scmp.eq.s32.totalorder %s25, 0
      %s28 = sadd.s32 %s27, 1
      %s29 = scalar_select %p26, %s27, %s28
      %p32 = pneg %p26
      %p33 = scmp.eq.s32.totalorder %s17, 1
      %p34 = por %p32, %p33
      %p35 = scmp.ne.s32.totalorder %s27, %s30
      %p36 = scmp.eq.s32.totalorder %s17, 0
      %p37 = por %p35, %p36
      %p38 = scmp.ne.s32.totalorder %s27, %s30
      %p39 = scmp.eq.s32.totalorder %s22, 1
      %p40 = por %p38, %p39
      %p41 = scmp.ne.s32.totalorder %s30, %s31
      %p42 = scmp.eq.s32.totalorder %s22, 0
      %p43 = por %p41, %p42
      %p44 = scmp.ne.s32.totalorder %s30, %s31
      %p45 = scmp.eq.s32.totalorder %s23, 1
      %p46 = por %p44, %p45
      %p48 = scmp.ne.s32.totalorder %s31, %s47
      %p49 = scmp.eq.s32.totalorder %s23, 0
      %p50 = por %p48, %p49
      %s52 = sadd.s32 %s51, 1
      %p55 = scmp.eq.s32.totalorder %s17, 1
      %p56 = scmp.ne.s32.totalorder %s51, %s53
      %p57 = scmp.eq.s32.totalorder %s17, 0
      %p58 = por %p56, %p57
      %p59 = scmp.ne.s32.totalorder %s51, %s53
      %p60 = scmp.eq.s32.totalorder %s22, 1
      %p61 = por %p59, %p60
      %p62 = scmp.ne.s32.totalorder %s53, %s54
      %p63 = scmp.eq.s32.totalorder %s22, 0
      %p64 = por %p62, %p63
      %p65 = scmp.ne.s32.totalorder %s53, %s54
      %p66 = scmp.eq.s32.totalorder %s23, 1
      %p67 = por %p65, %p66
      %p69 = scmp.ne.s32.totalorder %s54, %s68
      %p70 = scmp.eq.s32.totalorder %s23, 0
      %p71 = por %p69, %p70
      %s73 = sadd.s32 %s72, 1
      %p76 = scmp.eq.s32.totalorder %s17, 1
      %p77 = scmp.ne.s32.totalorder %s72, %s74
      %p78 = scmp.eq.s32.totalorder %s17, 0
      %p79 = por %p77, %p78
      %p80 = scmp.ne.s32.totalorder %s72, %s74
      %p81 = scmp.eq.s32.totalorder %s22, 1
      %p82 = por %p80, %p81
      %p83 = scmp.ne.s32.totalorder %s74, %s75
      %p84 = scmp.eq.s32.totalorder %s22, 0
      %p85 = por %p83, %p84
      %p86 = scmp.ne.s32.totalorder %s74, %s75
      %p87 = scmp.eq.s32.totalorder %s23, 1
      %p88 = por %p86, %p87
      %p90 = scmp.ne.s32.totalorder %s75, %s89
      %p91 = scmp.eq.s32.totalorder %s23, 0
      %p92 = por %p90, %p91
      %s94 = sadd.s32 %s93, 1
      %p97 = scmp.eq.s32.totalorder %s17, 1
      %p98 = scmp.ne.s32.totalorder %s93, %s95
      %p99 = scmp.eq.s32.totalorder %s17, 0
      %p100 = por %p98, %p99
      %p101 = scmp.ne.s32.totalorder %s93, %s95
      %p102 = scmp.eq.s32.totalorder %s22, 1
      %p103 = por %p101, %p102
      %p104 = scmp.ne.s32.totalorder %s95, %s96
      %p105 = scmp.eq.s32.totalorder %s22, 0
      %p106 = por %p104, %p105
      %p107 = scmp.ne.s32.totalorder %s95, %s96
      %p108 = scmp.eq.s32.totalorder %s23, 1
      %p109 = por %p107, %p108
      %p111 = scmp.ne.s32.totalorder %s96, %s110
      %p112 = scmp.eq.s32.totalorder %s23, 0
      %p113 = por %p111, %p112
      %s114 = ssub.s32 %s17, %s24
      %p115 = scmp.eq.s32.totalorder %s114, 0
      %s117 = sadd.s32 %s116, 1
      %s118 = scalar_select %p115, %s116, %s117
      %p121 = pneg %p115
      %p122 = scmp.eq.s32.totalorder %s17, 1
      %p123 = por %p121, %p122
      %p124 = scmp.ne.s32.totalorder %s116, %s119
      %p125 = scmp.eq.s32.totalorder %s17, 0
      %p126 = por %p124, %p125
      %p127 = scmp.ne.s32.totalorder %s116, %s119
      %p128 = scmp.eq.s32.totalorder %s22, 1
      %p129 = por %p127, %p128
      %p130 = scmp.ne.s32.totalorder %s119, %s120
      %p131 = scmp.eq.s32.totalorder %s22, 0
      %p132 = por %p130, %p131
      %p133 = scmp.ne.s32.totalorder %s119, %s120
      %p134 = scmp.eq.s32.totalorder %s23, 1
      %p135 = por %p133, %p134
      %p137 = scmp.ne.s32.totalorder %s120, %s136
      %p138 = scmp.eq.s32.totalorder %s23, 0
      %p139 = por %p137, %p138
      %p140 = scmp.le.s32.totalorder 1, %s17
      %p141 = scmp.lt.s32.totalorder %s17, 3
      %p142 = pnand %p140, %p141
      %p143 = pneg %p142
      // Predicated region
      $region9: #{tpu_custom_call.1} parent=5 // pred_check
        _
      $region10: #{tpu_custom_call.1} parent=5 // pred_check_branch
        %145 = sbr.rel (%p142) target = $region12
      $region11: #{tpu_custom_call.1} parent=5 // pred_region
        %s146 = ssub.s32 %s17, 1
        // Predicated region
        $region13: #{tpu_custom_call.1} parent=11 // pred_check
          %p147 = pneg %p64
        $region14: #{tpu_custom_call.1} parent=11 // pred_check_branch
          %149 = sbr.rel (%p147) target = $region16
        $region15: #{tpu_custom_call.1} parent=11 // pred_region
          %s151 = ssub.s32 256, 256
          %152 = vsyncadd [#allocation6], %s151
          %s153 = sshll.u32 [#allocation5], 4
          %s154 = int_to_ptr.vmem [resolvable:$true] %s153
          %159 = dma.hbm_to_vmem [thread:$0]  %s1, 256, %s154, [#allocation6], 64, 64, 4
        $region16: #{tpu_custom_call.1} parent=11 // pred_fallthru
          _
        // Predicated region
        $region17: #{tpu_custom_call.1} parent=11 // pred_check
          %p160 = pneg %p85
        $region18: #{tpu_custom_call.1} parent=11 // pred_check_branch
          %162 = sbr.rel (%p160) target = $region20
        $region19: #{tpu_custom_call.1} parent=11 // pred_region
          %s164 = ssub.s32 1024, 1024
          %165 = vsyncadd [#allocation6], %s164
          %s166 = sshll.u32 [#allocation7], 4
          %s167 = int_to_ptr.vmem [resolvable:$true] %s166
          %172 = dma.hbm_to_vmem [thread:$0]  %s2, 1024, %s167, [#allocation6], 64, 64, 4
        $region20: #{tpu_custom_call.1} parent=11 // pred_fallthru
          _
        // Predicated region
        $region21: #{tpu_custom_call.1} parent=11 // pred_check
          %p173 = pneg %p106
        $region22: #{tpu_custom_call.1} parent=11 // pred_check_branch
          %175 = sbr.rel (%p173) target = $region24
        $region23: #{tpu_custom_call.1} parent=11 // pred_region
          _
        $region24: #{tpu_custom_call.1} parent=11 // pred_fallthru
          _
      $region12: #{tpu_custom_call.1} parent=5 // pred_fallthru
        _
      %p176 = scmp.lt.s32.totalorder %s17, 2
      // Predicated region
      $region25: #{tpu_custom_call.1} parent=5 // pred_check
        %p177 = pneg %p176
      $region26: #{tpu_custom_call.1} parent=5 // pred_check_branch
        %179 = sbr.rel (%p177) target = $region28
      $region27: #{tpu_custom_call.1} parent=5 // pred_region
        // Predicated region
        $region29: #{tpu_custom_call.1} parent=27 // pred_check
          %p180 = pneg %p37
        $region30: #{tpu_custom_call.1} parent=27 // pred_check_branch
          %182 = sbr.rel (%p180) target = $region32
        $region31: #{tpu_custom_call.1} parent=27 // pred_region
          %s183 = sand.u32 %s27, 1
          %s184 = scalar_lea.sflag [#allocation3], %s183
          %s185 = sand.u32 %s27, 1
          %s186 = smul.addr %s185, 8
          %s187 = scalar_lea.vmem [#allocation2], %s186
          %s188 = smul.u32 2, %s17
          %s190 = ssub.s32 128, 128
          %191 = vsyncadd %s184, %s190
          %s192 = smul.addr %s188, 64
          %s193 = scalar_lea.hbm %s0, %s192
          %s194 = sshll.u32 %s187, 4
          %s195 = int_to_ptr.vmem [resolvable:$true] %s194
          %200 = dma.hbm_to_vmem [thread:$0]  %s193, 128, %s195, %s184, 64, 64, 4
        $region32: #{tpu_custom_call.1} parent=27 // pred_fallthru
          _
      $region28: #{tpu_custom_call.1} parent=5 // pred_fallthru
        _
      %p201 = scmp.le.s32.totalorder 1, %s17
      %p202 = scmp.lt.s32.totalorder %s17, 3
      %p203 = pnand %p201, %p202
      %p204 = pneg %p203
      // Predicated region
      $region33: #{tpu_custom_call.1} parent=5 // pred_check
        _
      $region34: #{tpu_custom_call.1} parent=5 // pred_check_branch
        %206 = sbr.rel (%p203) target = $region36
      $region35: #{tpu_custom_call.1} parent=5 // pred_region
        %s207 = ssub.s32 %s17, 1
        %s208 = sand.u32 %s30, 1
        %s209 = scalar_lea.sflag [#allocation3], %s208
        %s210 = sand.u32 %s30, 1
        %s211 = smul.addr %s210, 8
        %s212 = scalar_lea.vmem [#allocation2], %s211
        // Predicated region
        $region37: #{tpu_custom_call.1} parent=35 // pred_check
          %p213 = pneg %p43
        $region38: #{tpu_custom_call.1} parent=35 // pred_check_branch
          %215 = sbr.rel (%p213) target = $region40
        $region39: #{tpu_custom_call.1} parent=35 // pred_region
          %216 = dma.done %s209, 128
        $region40: #{tpu_custom_call.1} parent=35 // pred_fallthru
          _
        // Predicated region
        $region41: #{tpu_custom_call.1} parent=35 // pred_check
          %p217 = pneg %p64
        $region42: #{tpu_custom_call.1} parent=35 // pred_check_branch
          %219 = sbr.rel (%p217) target = $region44
        $region43: #{tpu_custom_call.1} parent=35 // pred_region
          %220 = dma.done [#allocation6], 256
        $region44: #{tpu_custom_call.1} parent=35 // pred_fallthru
          _
        // Predicated region
        $region45: #{tpu_custom_call.1} parent=35 // pred_check
          %p221 = pneg %p85
        $region46: #{tpu_custom_call.1} parent=35 // pred_check_branch
          %223 = sbr.rel (%p221) target = $region48
        $region47: #{tpu_custom_call.1} parent=35 // pred_region
          %224 = dma.done [#allocation6], 1024
        $region48: #{tpu_custom_call.1} parent=35 // pred_fallthru
          _
        %s225 = sand.u32 %s30, 1
        %s226 = scalar_lea.sflag [#allocation3], %s225
        %s227 = sand.u32 %s30, 1
        %s228 = smul.addr %s227, 8
        %s229 = scalar_lea.vmem [#allocation2], %s228
        %p230 = pneg %p43
        %p231 = pneg %p40
        %p232 = pneg %p64
        %p233 = pneg %p61
        %p234 = pneg %p85
        %p235 = pneg %p82
        %p236 = pneg %p106
        %p237 = pneg %p103
        %p238 = pneg %p132
        %p239 = pneg %p129
        %s240 = sand.u32 %s119, 1
        %s241 = scalar_lea.sflag [#allocation4], %s240
        %s242 = sand.u32 %s119, 1
        %s243 = smul.addr %s242, 8
        %s244 = scalar_lea.vmem [#allocation8], %s243
        %s245 = smul.u32 2, %s22
        %s246 = smul.u32 2, %s22
        %v248 = vld [vmem:[%s212] sm:$0xf]
        %v249 = vld [vmem:[%s212 + $0x4] sm:$0xf]
        %v250 = vld [vmem:[#allocation5] sm:$0xf]
        %v251 = vld [vmem:[#allocation5 + $0x4] sm:$0xf]
        %v252 = vld [vmem:[#allocation5 + $0x8] sm:$0xf]
        %v253 = vld [vmem:[#allocation5 + $0xc] sm:$0xf]
        %v256 = vunpack.c.l.b16 %v248
        %v257 = vunpack.c.l.b16 %v249
        %v258 = vpack.c.b16 %v257, %v256
        %v263 = vunpack.c.l.b16 %v250
        %v264 = vunpack.c.l.b16 %v251
        %v265 = vunpack.c.l.b16 %v252
        %v266 = vunpack.c.l.b16 %v253
        %v267 = vpack.c.b16 %v264, %v263
        %v268 = vpack.c.b16 %v266, %v265
        %vm271 = vcmask 261120
        %v273 = vsel %vm271, %v258, 0
        %275 = vmatprep.subr.bf16.mxu0 0
        %276 = vmatpush1.bf16.msra.mxu0 %v267
        %277 = vmatprep.subr.bf16.mxu0 0
        %278 = vmatpush1.bf16.msra.mxu0 %v268
        %279 = vmatprep.subr.bf16.mxu0 0
        %280 = vmatpush1.bf16.msra.mxu0 0
        %281 = vmatprep.subr.bf16.mxu0 0
        %282 = vmatpush1.bf16.msra.mxu0 0
        %283 = vmatprep.subr.bf16.mxu0 0
        %284 = vmatpush1.bf16.msra.mxu0 0
        %285 = vmatprep.subr.bf16.mxu0 0
        %286 = vmatpush1.bf16.msra.mxu0 0
        %287 = vmatprep.subr.bf16.mxu0 0
        %288 = vmatpush1.bf16.msra.mxu0 0
        %289 = vmatprep.subr.bf16.mxu0 0
        %290 = vmatpush1.bf16.msra.mxu0 0
        %291 = vmatprep.subr.bf16.mxu0 0
        %292 = vmatpush1.bf16.msra.mxu0 0
        %293 = vmatprep.subr.bf16.mxu0 0
        %294 = vmatpush1.bf16.msra.mxu0 0
        %295 = vmatprep.subr.bf16.mxu0 0
        %296 = vmatpush1.bf16.msra.mxu0 0
        %297 = vmatprep.subr.bf16.mxu0 0
        %298 = vmatpush1.bf16.msra.mxu0 0
        %299 = vmatprep.subr.bf16.mxu0 0
        %300 = vmatpush1.bf16.msra.mxu0 0
        %301 = vmatprep.subr.bf16.mxu0 0
        %302 = vmatpush1.bf16.msra.mxu0 0
        %303 = vmatprep.subr.bf16.mxu0 0
        %304 = vmatpush1.bf16.msra.mxu0 0
        %305 = vmatprep.subr.bf16.mxu0 0
        %306 = vmatpush1.bf16.msra.mxu0 0
        %307 = vmatprep.mubr.bf16.mxu0 0
        %308 = vmatmul.mubr.bf16.gmra.mrb[0].mxu0 %v273
        %v309 = vpop.f32.mrb[0].mxu0
        %v310 = vadd.f32 0.0, %v309
        %v311 = vpop.f32.mrb[0].mxu0
        %v312 = vpop.f32.mrb[0].mxu0
        %v313 = vadd.f32 0.0, %v312
        %v314 = vpop.f32.mrb[0].mxu0
        %315 = vdwg.mxu0
        %v316 = vpack.c.bf16 %v313, %v310
        %v317 = vld [vmem:[#allocation7] sm:$0xf]
        %v318 = vld [vmem:[#allocation7 + $0x4] sm:$0xf]
        %v319 = vld [vmem:[#allocation7 + $0x8] sm:$0xf]
        %v320 = vld [vmem:[#allocation7 + $0xc] sm:$0xf]
        %v321 = vld [vmem:[#allocation7 + $0x10] sm:$0xf]
        %v322 = vld [vmem:[#allocation7 + $0x14] sm:$0xf]
        %v323 = vld [vmem:[#allocation7 + $0x18] sm:$0xf]
        %v324 = vld [vmem:[#allocation7 + $0x1c] sm:$0xf]
        %v325 = vld [vmem:[#allocation7 + $0x20] sm:$0xf]
        %v326 = vld [vmem:[#allocation7 + $0x24] sm:$0xf]
        %v327 = vld [vmem:[#allocation7 + $0x28] sm:$0xf]
        %v328 = vld [vmem:[#allocation7 + $0x2c] sm:$0xf]
        %v329 = vld [vmem:[#allocation7 + $0x30] sm:$0xf]
        %v330 = vld [vmem:[#allocation7 + $0x34] sm:$0xf]
        %v331 = vld [vmem:[#allocation7 + $0x38] sm:$0xf]
        %v332 = vld [vmem:[#allocation7 + $0x3c] sm:$0xf]
        %v333 = vld [vmem:[%s3] sm:$0x1]
        %v335 = vlaneseq
        %v336 = vshrl.u32 %v335, 7
        %v337 = vsub.s32 0, %v336
        %v338 = vrot.slane %v333, %v337
        %v356 = vunpack.c.l.b16 %v317
        %v357 = vunpack.c.l.b16 %v318
        %v358 = vunpack.c.l.b16 %v319
        %v359 = vunpack.c.l.b16 %v320
        %v360 = vunpack.c.l.b16 %v321
        %v361 = vunpack.c.l.b16 %v322
        %v362 = vunpack.c.l.b16 %v323
        %v363 = vunpack.c.l.b16 %v324
        %v364 = vunpack.c.l.b16 %v325
        %v365 = vunpack.c.l.b16 %v326
        %v366 = vunpack.c.l.b16 %v327
        %v367 = vunpack.c.l.b16 %v328
        %v368 = vunpack.c.l.b16 %v329
        %v369 = vunpack.c.l.b16 %v330
        %v370 = vunpack.c.l.b16 %v331
        %v371 = vunpack.c.l.b16 %v332
        %v372 = vpack.c.b16 %v357, %v356
        %v373 = vpack.c.b16 %v359, %v358
        %v374 = vpack.c.b16 %v361, %v360
        %v375 = vpack.c.b16 %v363, %v362
        %v376 = vpack.c.b16 %v365, %v364
        %v377 = vpack.c.b16 %v367, %v366
        %v378 = vpack.c.b16 %v369, %v368
        %v379 = vpack.c.b16 %v371, %v370
        %388 = vmatprep.subr.bf16.mxu0 0
        %389 = vmatpush1.bf16.msra.mxu0 %v372
        %390 = vmatprep.subr.bf16.mxu0 0
        %391 = vmatpush1.bf16.msra.mxu0 %v373
        %392 = vmatprep.subr.bf16.mxu0 0
        %393 = vmatpush1.bf16.msra.mxu0 %v374
        %394 = vmatprep.subr.bf16.mxu0 0
        %395 = vmatpush1.bf16.msra.mxu0 %v375
        %396 = vmatprep.subr.bf16.mxu0 0
        %397 = vmatpush1.bf16.msra.mxu0 %v376
        %398 = vmatprep.subr.bf16.mxu0 0
        %399 = vmatpush1.bf16.msra.mxu0 %v377
        %400 = vmatprep.subr.bf16.mxu0 0
        %401 = vmatpush1.bf16.msra.mxu0 %v378
        %402 = vmatprep.subr.bf16.mxu0 0
        %403 = vmatpush1.bf16.msra.mxu0 %v379
        %404 = vmatprep.subr.bf16.mxu0 0
        %405 = vmatpush1.bf16.msra.mxu0 0
        %406 = vmatprep.subr.bf16.mxu0 0
        %407 = vmatpush1.bf16.msra.mxu0 0
        %408 = vmatprep.subr.bf16.mxu0 0
        %409 = vmatpush1.bf16.msra.mxu0 0
        %410 = vmatprep.subr.bf16.mxu0 0
        %411 = vmatpush1.bf16.msra.mxu0 0
        %412 = vmatprep.subr.bf16.mxu0 0
        %413 = vmatpush1.bf16.msra.mxu0 0
        %414 = vmatprep.subr.bf16.mxu0 0
        %415 = vmatpush1.bf16.msra.mxu0 0
        %416 = vmatprep.subr.bf16.mxu0 0
        %417 = vmatpush1.bf16.msra.mxu0 0
        %418 = vmatprep.subr.bf16.mxu0 0
        %419 = vmatpush1.bf16.msra.mxu0 0
        %420 = vmatprep.mubr.bf16.mxu0 0
        %421 = vmatmul.mubr.bf16.gmra.mrb[0].mxu0 %v316
        %v422 = vpop.f32.mrb[0].mxu0
        %v423 = vadd.f32 %v338, %v422
        %v424 = vpop.f32.mrb[0].mxu0
        %v425 = vpop.f32.mrb[0].mxu0
        %v426 = vadd.f32 %v338, %v425
        %v427 = vpop.f32.mrb[0].mxu0
        %428 = vdwg.mxu0
        %v429 = vmax.f32 %v423, 0.0
        %v430 = vmax.f32 %v426, 0.0
        %v431 = vpack.c.bf16 %v430, %v429
        %v433 = vunpack.c.l.b16 %v431
        %v434 = vunpack.c.h.b16 %v431
        %v435 = vpack.c.b16 %v433, %v433
        %v436 = vpack.c.b16 %v434, %v434
        %439 = vst [vmem:[%s244] sm:$0xf] %v435
        %440 = vst [vmem:[%s244 + $0x4] sm:$0xf] %v436
        %s441 = sand.u32 %s119, 1
        %s442 = scalar_lea.sflag [#allocation4], %s441
        %s443 = sand.u32 %s119, 1
        %s444 = smul.addr %s443, 8
        %s445 = scalar_lea.vmem [#allocation8], %s444
        // Predicated region
        $region49: #{tpu_custom_call.1} parent=35 // pred_check
          %p446 = pneg %p129
        $region50: #{tpu_custom_call.1} parent=35 // pred_check_branch
          %448 = sbr.rel (%p446) target = $region52
        $region51: #{tpu_custom_call.1} parent=35 // pred_region
          %s449 = smul.u32 2, %s22
          %s451 = ssub.s32 128, 128
          %452 = vsyncadd %s442, %s451
          %s453 = smul.addr %s449, 64
          %s454 = scalar_lea.hbm %s4, %s453
          %s455 = sshll.u32 %s445, 4
          %s456 = int_to_ptr.vmem [resolvable:$true] %s455
          %461 = dma.vmem_to_hbm [thread:$0]  %s456, 128, %s454, %s442, 64, 64, 4
        $region52: #{tpu_custom_call.1} parent=35 // pred_fallthru
          _
      $region36: #{tpu_custom_call.1} parent=5 // pred_fallthru
        _
      %p462 = scmp.le.s32.totalorder 2, %s17
      // Predicated region
      $region53: #{tpu_custom_call.1} parent=5 // pred_check
        %p463 = pneg %p462
      $region54: #{tpu_custom_call.1} parent=5 // pred_check_branch
        %465 = sbr.rel (%p463) target = $region56
      $region55: #{tpu_custom_call.1} parent=5 // pred_region
        %s466 = ssub.s32 %s17, 2
        // Predicated region
        $region57: #{tpu_custom_call.1} parent=55 // pred_check
          %p467 = pneg %p135
        $region58: #{tpu_custom_call.1} parent=55 // pred_check_branch
          %469 = sbr.rel (%p467) target = $region60
        $region59: #{tpu_custom_call.1} parent=55 // pred_region
          %s470 = sand.u32 %s120, 1
          %s471 = scalar_lea.sflag [#allocation4], %s470
          %s472 = sand.u32 %s120, 1
          %s473 = smul.addr %s472, 8
          %s474 = scalar_lea.vmem [#allocation8], %s473
          %475 = dma.done %s471, 128
        $region60: #{tpu_custom_call.1} parent=55 // pred_fallthru
          _
      $region56: #{tpu_custom_call.1} parent=5 // pred_fallthru
        _
    $region6: #{tpu_custom_call.1} parent=1 // loop_footer
      %s21 = sadd.s32 1, %s17
    $region7: #{tpu_custom_call.1} parent=1 // loop_footer_branch
      %16 = sbr.rel target = $region3
    $region8: #{tpu_custom_call.1} parent=1 // loop_exit
      _
    %476 = vsyncpa [#allocation3], 1
    %s477 = scalar_lea.sflag [#allocation3], 1
    %478 = vsyncpa %s477, 1
    %479 = vsyncpa [#allocation6], 1
    %480 = vsyncpa [#allocation4], 1
    %s481 = scalar_lea.sflag [#allocation4], 1
    %482 = vsyncpa %s481, 1

</llo_original>
